<compile_context>
chip_gen: v7x
topology: tpu7x:2x2x1
jax: 0.10.0
libtpu: 0.0.40
codegen_flags: <defaults>
</compile_context>

<pallas_src>
import functools

import jax
import jax.numpy as jnp
from jax.experimental import pallas as pl
from jax.experimental.pallas import tpu as pltpu


def _round_up(v, m):
    return (v + m - 1) // m * m


def _activate(y, activation):
    if activation == 'relu':
        return jnp.maximum(y, 0.0)
    # ELU(alpha=1.0); expm1(min(y,0)) is inf-safe and accurate near 0.
    return jnp.where(y > 0, y, jnp.expm1(jnp.minimum(y, 0.0)))


# ---------------------------------------------------------------------------
# Kernel A: whole N*L_out slab resident per C_out tile (single pass).
# ---------------------------------------------------------------------------
def _fused_kernel(w_ref, p_ref, g_ref, beta_ref, o_ref, *,
                  nl_valid, eps, activation):
    """w:(Tco,CKp) bf16, p:(CKp,NLp) bf16, g/beta:(Tco,1) f32, o:(Tco,NLp)."""
    y = jnp.dot(w_ref[...], p_ref[...], preferred_element_type=jnp.float32)

    inv_n = jnp.float32(1.0 / nl_valid)
    # Padded lane columns of `patches` are zero, so their conv output is exactly
    # zero and the unmasked lane sums already equal the sums over valid columns.
    mean = jnp.sum(y, axis=1, keepdims=True) * inv_n
    # Sum-of-squares form (no iota/where masking). f32 accumulation; clamp
    # guards the rare |mean| >> std cancellation case.
    var = jnp.maximum(
        jnp.sum(y * y, axis=1, keepdims=True) * inv_n - mean * mean, 0.0)

    scale = g_ref[...] * jax.lax.rsqrt(var + eps)
    shift = beta_ref[...] - mean * scale
    o_ref[...] = _activate(y * scale + shift, activation).astype(o_ref.dtype)


# ---------------------------------------------------------------------------
# Kernel B: NL-tiled, two passes over the NL axis (VMEM fallback, v7x):
#   pass 0 accumulates per-channel sum / sum-of-squares,
#   pass 1 recomputes the cheap conv tile and applies scale/shift + activation.
# ---------------------------------------------------------------------------
def _tiled_kernel(w_ref, p_ref, g_ref, beta_ref, o_ref,
                  sum_ref, ssq_ref, scale_ref, shift_ref, *,
                  nl_valid, eps, activation):
    p = pl.program_id(1)
    j = pl.program_id(2)

    @pl.when(jnp.logical_and(p == 0, j == 0))
    def _():
        sum_ref[...] = jnp.zeros_like(sum_ref)
        ssq_ref[...] = jnp.zeros_like(ssq_ref)

    y = jnp.dot(w_ref[...], p_ref[...], preferred_element_type=jnp.float32)

    @pl.when(p == 0)
    def _():
        sum_ref[...] += jnp.sum(y, axis=1, keepdims=True)
        ssq_ref[...] += jnp.sum(y * y, axis=1, keepdims=True)
        o_ref[...] = y.astype(o_ref.dtype)   # placeholder; overwritten in pass 1

    @pl.when(jnp.logical_and(p == 1, j == 0))
    def _():
        inv_n = jnp.float32(1.0 / nl_valid)
        mean = sum_ref[...] * inv_n
        var = jnp.maximum(ssq_ref[...] * inv_n - mean * mean, 0.0)
        sc = g_ref[...] * jax.lax.rsqrt(var + eps)
        scale_ref[...] = sc
        shift_ref[...] = beta_ref[...] - mean * sc

    @pl.when(p == 1)
    def _():
        o_ref[...] = _activate(y * scale_ref[...] + shift_ref[...],
                               activation).astype(o_ref.dtype)


def _vmem_capacity_bytes():
    try:
        info = pltpu.get_tpu_info()
        cap = int(getattr(info, 'vmem_capacity_bytes', 0))
        if cap > 0:
            return cap
    except Exception:
        pass
    return 128 * 1024 * 1024   # v5e/v6e default


def conv_bn_act(x, weight, bias, gamma, beta, *, stride=1, activation='relu',
                eps=1e-5, mxu_dtype=jnp.bfloat16, max_nl_tile=None):
    """Fused Conv1d -> BatchNorm1d (training-mode batch stats) -> ReLU/ELU.

    x: (N, C_in, L); weight: (C_out, C_in, K); bias/gamma/beta: (C_out,).
    Returns (N, C_out, L_out) in x.dtype.

    NOTE: matches PyTorch ConvBnAct.forward in *training* mode: with batch
    statistics the per-channel conv bias is exactly cancelled by the BN mean
    subtraction, so `bias` is accepted for API parity but unused. Eval-mode
    (running-stats) BN would need the bias added back.
    """
    del bias  # cancelled by training-mode BN mean subtraction
    n, c_in, l = x.shape
    c_out, c_in_w, k = weight.shape
    assert c_in_w == c_in
    pad = k // 2
    l_out = (l + 2 * pad - k) // stride + 1

    nl = n * l_out
    ck = c_in * k

    itemsize = jnp.dtype(mxu_dtype).itemsize
    out_dtype = x.dtype
    out_itemsize = jnp.dtype(out_dtype).itemsize

    align = 16 if itemsize == 2 else 8            # sublane tile for packed dtypes
    ck_pad = _round_up(ck, align)                 # clean contraction tiles

    # C_out tile: fill the MXU M dimension (up to 256 on v6e/v7x) ...
    tile_co = min(256, _round_up(c_out, align))
    c_out_pad = _round_up(c_out, tile_co)
    # ... but ensure the "parallel" grid axis has >= 2 steps when possible so
    # both v7x TensorCores get work.
    while c_out_pad // tile_co < 2 and tile_co > align:
        tile_co = _round_up(tile_co // 2, align)
        c_out_pad = _round_up(c_out, tile_co)

    nl_pad128 = _round_up(nl, 128)

    vmem_cap = _vmem_capacity_bytes() * 3 // 4    # leave headroom for compiler

    wt_b = tile_co * ck_pad * itemsize            # double-buffered
    small_b = 2 * tile_co * 4                     # gamma + beta tiles
    single_bytes = (ck_pad * nl_pad128 * itemsize              # patches, 1 buf
                    + 2 * (wt_b + tile_co * nl_pad128 * out_itemsize)
                    + 2 * small_b + (1 << 20))

    use_tiled = single_bytes > vmem_cap
    if max_nl_tile is not None:                   # test hook / manual override
        use_tiled = True

    if not use_tiled:
        tile_nl = nl_pad128
    else:
        if max_nl_tile is not None:
            tile_nl = min(_round_up(max_nl_tile, 128), nl_pad128)
        else:
            per_col = 2 * (ck_pad * itemsize + tile_co * out_itemsize)
            budget = vmem_cap - 2 * wt_b - 2 * small_b - (2 << 20)
            tile_nl = max(128, (budget // per_col) // 128 * 128)
            tile_nl = min(tile_nl, nl_pad128)
    nl_pad = _round_up(nl, tile_nl)

    # ---- wrapper-side im2col (layout plumbing; MXU operands in bf16) --------
    x_pad = jnp.pad(x.astype(jnp.float32), ((0, 0), (0, 0), (pad, pad)))
    span = (l_out - 1) * stride + 1
    # cols[n, ci, kk, lo] = x_pad[n, ci, lo*stride + kk]
    cols = jnp.stack([x_pad[:, :, kk:kk + span:stride] for kk in range(k)],
                     axis=2)                                  # (N, C_in, K, L_out)
    patches = cols.transpose(1, 2, 0, 3).reshape(ck, nl)      # (C_in*K, N*L_out)
    patches = jnp.pad(patches,
                      ((0, ck_pad - ck), (0, nl_pad - nl))).astype(mxu_dtype)

    w2 = weight.astype(jnp.float32).reshape(c_out, ck)
    w2 = jnp.pad(w2, ((0, c_out_pad - c_out),
                      (0, ck_pad - ck))).astype(mxu_dtype)
    g2 = jnp.pad(gamma.astype(jnp.float32), (0, c_out_pad - c_out),
                 constant_values=1.0).reshape(c_out_pad, 1)
    b2 = jnp.pad(beta.astype(jnp.float32),
                 (0, c_out_pad - c_out)).reshape(c_out_pad, 1)

    n_co = c_out_pad // tile_co

    if not use_tiled:
        vmem_bytes = int(min(vmem_cap, max(16 << 20, single_bytes)))
        kernel = functools.partial(_fused_kernel, nl_valid=nl, eps=eps,
                                   activation=activation)
        out_pad = pl.pallas_call(
            kernel,
            out_shape=jax.ShapeDtypeStruct((c_out_pad, nl_pad), out_dtype),
            grid_spec=pltpu.PrefetchScalarGridSpec(
                num_scalar_prefetch=0,
                grid=(n_co,),
                in_specs=[
                    pl.BlockSpec((tile_co, ck_pad), lambda i: (i, 0)),
                    # grid-invariant patches slab: fetched once, single-buffered
                    pl.BlockSpec((ck_pad, nl_pad), lambda i: (0, 0),
                                 pipeline_mode=pl.Buffered(1)),
                    pl.BlockSpec((tile_co, 1), lambda i: (i, 0)),
                    pl.BlockSpec((tile_co, 1), lambda i: (i, 0)),
                ],
                out_specs=pl.BlockSpec((tile_co, nl_pad), lambda i: (i, 0)),
            ),
            compiler_params=pltpu.CompilerParams(
                dimension_semantics=("parallel",),
                vmem_limit_bytes=vmem_bytes),
        )(w2, patches, g2, b2)
    else:
        n_nl = nl_pad // tile_nl
        tiled_bytes = (2 * (ck_pad * tile_nl * itemsize
                            + tile_co * tile_nl * out_itemsize)
                       + 2 * wt_b + 2 * small_b + 4 * tile_co * 4 + (2 << 20))
        vmem_bytes = int(min(vmem_cap, max(16 << 20, tiled_bytes)))
        kernel = functools.partial(_tiled_kernel, nl_valid=nl, eps=eps,
                                   activation=activation)
        out_pad = pl.pallas_call(
            kernel,
            out_shape=jax.ShapeDtypeStruct((c_out_pad, nl_pad), out_dtype),
            grid_spec=pltpu.PrefetchScalarGridSpec(
                num_scalar_prefetch=0,
                grid=(n_co, 2, n_nl),
                in_specs=[
                    pl.BlockSpec((tile_co, ck_pad), lambda i, p, j: (i, 0)),
                    pl.BlockSpec((ck_pad, tile_nl), lambda i, p, j: (0, j)),
                    pl.BlockSpec((tile_co, 1), lambda i, p, j: (i, 0)),
                    pl.BlockSpec((tile_co, 1), lambda i, p, j: (i, 0)),
                ],
                out_specs=pl.BlockSpec((tile_co, tile_nl),
                                       lambda i, p, j: (i, j)),
                scratch_shapes=[pltpu.VMEM((tile_co, 1), jnp.float32)] * 4,
            ),
            compiler_params=pltpu.CompilerParams(
                dimension_semantics=("parallel", "arbitrary", "arbitrary"),
                vmem_limit_bytes=vmem_bytes),
        )(w2, patches, g2, b2)

    # Lane-dense slab -> (N, C_out, L_out).
    out = out_pad[:c_out, :nl].reshape(c_out, n, l_out).transpose(1, 0, 2)
    return out


def _reference(x, weight, bias, gamma, beta, *, stride, activation, eps=1e-5):
    """Pure-JAX reference matching PyTorch ConvBnAct forward (training-mode BN)."""
    k = weight.shape[-1]
    pad = k // 2
    y = jax.lax.conv_general_dilated(
        x, weight, window_strides=(stride,), padding=[(pad, pad)],
        dimension_numbers=('NCH', 'OIH', 'NCH'))
    y = y + bias.reshape(1, -1, 1)
    mean = jnp.mean(y, axis=(0, 2), keepdims=True)
    var = jnp.mean((y - mean) ** 2, axis=(0, 2), keepdims=True)
    y = (y - mean) * jax.lax.rsqrt(var + eps)
    y = y * gamma.reshape(1, -1, 1) + beta.reshape(1, -1, 1)
    if activation == 'relu':
        return jnp.maximum(y, 0.0)
    return jnp.where(y > 0, y, jnp.expm1(jnp.minimum(y, 0.0)))


def _run_case(key, n, c_in, c_out, l, k, stride, act, max_nl_tile=None):
    kx, kw, kb, kg, kbt = jax.random.split(key, 5)
    x = jax.random.normal(kx, (n, c_in, l), dtype=jnp.float32)
    weight = 0.1 * jax.random.normal(kw, (c_out, c_in, k), dtype=jnp.float32)
    bias = 0.05 * jax.random.normal(kb, (c_out,), dtype=jnp.float32)
    gamma = 1.0 + 0.1 * jax.random.normal(kg, (c_out,), dtype=jnp.float32)
    beta = 0.05 * jax.random.normal(kbt, (c_out,), dtype=jnp.float32)

    out = conv_bn_act(x, weight, bias, gamma, beta, stride=stride,
                      activation=act, max_nl_tile=max_nl_tile)
    out = jax.block_until_ready(out)

    ref = _reference(x, weight, bias, gamma, beta, stride=stride, activation=act)
    pad = k // 2
    l_out = (l + 2 * pad - k) // stride + 1
    assert out.shape == (n, c_out, l_out), out.shape
    err = float(jnp.max(jnp.abs(out - ref)))
    # bf16 MXU operands: expect up to ~1e-2 error after BN renormalization.
    assert jnp.allclose(out, ref, atol=3e-2, rtol=3e-2), err


if __name__ == "__main__":
    key = jax.random.PRNGKey(0)
    k1, k2, k3 = jax.random.split(key, 3)
    # ConvBnAct(4, 8, kernel_size=3, stride=1, activation='relu') on (2, 4, 16)
    _run_case(k1, n=2, c_in=4, c_out=8, l=16, k=3, stride=1, act='relu')
    # ConvBnAct(4, 8, kernel_size=3, stride=2, activation='elu') on (2, 4, 16)
    _run_case(k2, n=2, c_in=4, c_out=8, l=16, k=3, stride=2, act='elu')
    # Exercise the NL-tiled two-pass fallback path (v7x VMEM-limited shapes).
    _run_case(k3, n=4, c_in=8, c_out=16, l=64, k=3, stride=1, act='elu',
              max_nl_tile=128)
    print("KERNEL_OK")
</pallas_src>

<mosaic_0001>
module attributes {stable_mosaic.version = 11 : i64} {
  func.func @_fused_kernel(%arg0: i32, %arg1: memref<16x16xbf16, #tpu.memory_space<vmem>>, %arg2: memref<16x128xbf16, #tpu.memory_space<vmem>>, %arg3: memref<16x1xf32, #tpu.memory_space<vmem>>, %arg4: memref<16x1xf32, #tpu.memory_space<vmem>>, %arg5: memref<16x128xf32, #tpu.memory_space<vmem>>) attributes {dimension_semantics = [#tpu.dimension_semantics<parallel>], iteration_bounds = array<i64: 1>, scalar_prefetch = 0 : i64, scratch_operands = 0 : i64, tpu.core_type = #tpu.core_type<tc>, window_params = [{transform_indices = @transform_0, window_bounds = array<i64: 16, 16>}, {pipeline_mode = #tpu.pipeline_mode<synchronous>, transform_indices = @transform_1, window_bounds = array<i64: 16, 128>}, {transform_indices = @transform_2, window_bounds = array<i64: 16, 1>}, {transform_indices = @transform_3, window_bounds = array<i64: 16, 1>}, {transform_indices = @transform_4, window_bounds = array<i64: 16, 128>}]} {
    %c0 = arith.constant 0 : index
    %c0_0 = arith.constant 0 : index
    %0 = vector.load %arg1[%c0, %c0_0] : memref<16x16xbf16, #tpu.memory_space<vmem>>, vector<16x16xbf16>
    %c0_1 = arith.constant 0 : index
    %c0_2 = arith.constant 0 : index
    %1 = vector.load %arg2[%c0_1, %c0_2] : memref<16x128xbf16, #tpu.memory_space<vmem>>, vector<16x128xbf16>
    %cst = arith.constant dense<0.000000e+00> : vector<16x128xf32>
    %2 = tpu.matmul %0, %1, %cst {dimension_numbers = #tpu.dot_dimension_numbers<[1], [0], [0], [1], [0, 0, 1, 1], [], []>} : vector<16x16xbf16>, vector<16x128xbf16>, vector<16x128xf32> -> vector<16x128xf32>
    %cst_3 = arith.constant dense<0.000000e+00> : vector<16xf32>
    %3 = vector.multi_reduction <add>, %2, %cst_3 [1] : vector<16x128xf32> to vector<16xf32>
    %4 = vector.shape_cast %3 : vector<16xf32> to vector<16x1xf32>
    %cst_4 = arith.constant 3.125000e-02 : f32
    %5 = vector.broadcast %cst_4 : f32 to vector<16x1xf32>
    %6 = arith.mulf %4, %5 : vector<16x1xf32>
    %7 = arith.mulf %2, %2 : vector<16x128xf32>
    %cst_5 = arith.constant dense<0.000000e+00> : vector<16xf32>
    %8 = vector.multi_reduction <add>, %7, %cst_5 [1] : vector<16x128xf32> to vector<16xf32>
    %9 = vector.shape_cast %8 : vector<16xf32> to vector<16x1xf32>
    %cst_6 = arith.constant 3.125000e-02 : f32
    %10 = vector.broadcast %cst_6 : f32 to vector<16x1xf32>
    %11 = arith.mulf %9, %10 : vector<16x1xf32>
    %12 = arith.mulf %6, %6 : vector<16x1xf32>
    %13 = arith.subf %11, %12 : vector<16x1xf32>
    %cst_7 = arith.constant 0.000000e+00 : f32
    %14 = vector.broadcast %cst_7 : f32 to vector<16x1xf32>
    %15 = arith.maximumf %13, %14 : vector<16x1xf32>
    %c0_8 = arith.constant 0 : index
    %c0_9 = arith.constant 0 : index
    %16 = vector.load %arg3[%c0_8, %c0_9] : memref<16x1xf32, #tpu.memory_space<vmem>>, vector<16x1xf32>
    %cst_10 = arith.constant 9.99999974E-6 : f32
    %17 = vector.broadcast %cst_10 : f32 to vector<16x1xf32>
    %18 = arith.addf %15, %17 : vector<16x1xf32>
    %19 = math.rsqrt %18 : vector<16x1xf32>
    %20 = arith.mulf %16, %19 : vector<16x1xf32>
    %c0_11 = arith.constant 0 : index
    %c0_12 = arith.constant 0 : index
    %21 = vector.load %arg4[%c0_11, %c0_12] : memref<16x1xf32, #tpu.memory_space<vmem>>, vector<16x1xf32>
    %22 = arith.mulf %6, %20 : vector<16x1xf32>
    %23 = arith.subf %21, %22 : vector<16x1xf32>
    %24 = vector.broadcast %20 : vector<16x1xf32> to vector<16x128xf32>
    %25 = arith.mulf %2, %24 : vector<16x128xf32>
    %26 = vector.broadcast %23 : vector<16x1xf32> to vector<16x128xf32>
    %27 = arith.addf %25, %26 : vector<16x128xf32>
    %cst_13 = arith.constant 0.000000e+00 : f32
    %28 = vector.broadcast %cst_13 : f32 to vector<16x128xf32>
    %29 = arith.maximumf %27, %28 : vector<16x128xf32>
    %c0_14 = arith.constant 0 : index
    %c0_15 = arith.constant 0 : index
    %30 = vector.load %arg5[%c0_14, %c0_15] : memref<16x128xf32, #tpu.memory_space<vmem>>, vector<16x128xf32>
    tpu.vector_store %arg5[%c0_14, %c0_15], %29 {strides = array<i32>} : memref<16x128xf32, #tpu.memory_space<vmem>>, vector<16x128xf32>,
    return
  }
  func.func @transform_0(%arg0: i32) -> (i32, i32) {
    %c0_i32 = arith.constant 0 : i32
    %c0_i32_0 = arith.constant 0 : i32
    return %arg0, %c0_i32 : i32, i32
  }
  func.func @transform_1(%arg0: i32) -> (i32, i32) {
    %c0_i32 = arith.constant 0 : i32
    %c0_i32_0 = arith.constant 0 : i32
    %c0_i32_1 = arith.constant 0 : i32
    return %c0_i32, %c0_i32_0 : i32, i32
  }
  func.func @transform_2(%arg0: i32) -> (i32, i32) {
    %c0_i32 = arith.constant 0 : i32
    %c0_i32_0 = arith.constant 0 : i32
    return %arg0, %c0_i32 : i32, i32
  }
  func.func @transform_3(%arg0: i32) -> (i32, i32) {
    %c0_i32 = arith.constant 0 : i32
    %c0_i32_0 = arith.constant 0 : i32
    return %arg0, %c0_i32 : i32, i32
  }
  func.func @transform_4(%arg0: i32) -> (i32, i32) {
    %c0_i32 = arith.constant 0 : i32
    %c0_i32_0 = arith.constant 0 : i32
    return %arg0, %c0_i32 : i32, i32
  }
}

</mosaic_0001>

<llo_original>
// kernel: tpu_custom_call.1
$region0: #{tpu_custom_call.1}
  #allocation0 [shape = 'u32[]', space=smem, size = 0x4, offset = 0x4, fixed_abs, tag = 'smem constant byte address 0x4 - core index']
  #allocation1 [shape = 'u32[144,128]{1,0:T(1,128)}', space=vmem, size = 0x12000, scoped, tag = 'internal scratch']
  %s0 = inlined_call_operand.vmem [shape: bf16[16,16], index: 0, kind: input, shape index: {}]
  %s1 = inlined_call_operand.vmem [shape: bf16[16,128], index: 1, kind: input, shape index: {}]
  %s2 = inlined_call_operand.vmem [shape: f32[16,1], index: 2, kind: input, shape index: {}]
  %s3 = inlined_call_operand.vmem [shape: f32[16,1], index: 3, kind: input, shape index: {}]
  %s4 = inlined_call_operand.hbm [shape: f32[16,128], index: 4, kind: output, shape index: {}]
  %s5 = sld [smem:[#allocation0]]
  $region26: #{tpu_custom_call.1} parent=0
    _
  %s7 = ssub.s32 1, %s5
  %s8 = scalar_select 0, %s7, %s5
  $region1: #{tpu_custom_call.1} parent=0
    #allocation2 [shape = 'u8[8192]{0}', space=vmem, size = 0x2000, scoped, tag = 'output window, operand 0, single buffered']
    #allocation3 [shape = 's32[1]{0}', space=sflag, size = 0x4, scoped, tag = 'scoped memory for tpu_custom_call.1']
    %9 = vsyncpa [#allocation3], 0
    // Predicated region
    $region2: #{tpu_custom_call.1} parent=1 // pred_check
      _
    $region3: #{tpu_custom_call.1} parent=1 // pred_check_branch
      %11 = sbr.rel (0) target = $region5
    $region4: #{tpu_custom_call.1} parent=1 // pred_region
      _
    $region5: #{tpu_custom_call.1} parent=1 // pred_fallthru
      _
    // Predicated region
    $region6: #{tpu_custom_call.1} parent=1 // pred_check
      _
    $region7: #{tpu_custom_call.1} parent=1 // pred_check_branch
      %13 = sbr.rel (0) target = $region9
    $region8: #{tpu_custom_call.1} parent=1 // pred_region
      _
    $region9: #{tpu_custom_call.1} parent=1 // pred_fallthru
      _
    // Predicated region
    $region10: #{tpu_custom_call.1} parent=1 // pred_check
      _
    $region11: #{tpu_custom_call.1} parent=1 // pred_check_branch
      %15 = sbr.rel (0) target = $region13
    $region12: #{tpu_custom_call.1} parent=1 // pred_region
      _
    $region13: #{tpu_custom_call.1} parent=1 // pred_fallthru
      _
    // Predicated region
    $region14: #{tpu_custom_call.1} parent=1 // pred_check
      _
    $region15: #{tpu_custom_call.1} parent=1 // pred_check_branch
      %17 = sbr.rel (0) target = $region17
    $region16: #{tpu_custom_call.1} parent=1 // pred_region
      _
    $region17: #{tpu_custom_call.1} parent=1 // pred_fallthru
      _
    %v19 = vld [vmem:[%s0] sm:$0xf]
    %v20 = vld [vmem:[%s0 + $0x4] sm:$0xf]
    %v21 = vld [vmem:[%s1] sm:$0xf]
    %v22 = vld [vmem:[%s1 + $0x4] sm:$0xf]
    %v25 = vunpack.c.l.b16 %v19
    %v26 = vunpack.c.l.b16 %v20
    %v27 = vpack.c.b16 %v26, %v25
    %v30 = vunpack.c.l.b16 %v21
    %v31 = vunpack.c.l.b16 %v22
    %v32 = vpack.c.b16 %v31, %v30
    %vm34 = vcmask 130048
    %v36 = vsel %vm34, %v27, 0
    %38 = vmatprep.subr.bf16.mxu0 0
    %39 = vmatpush1.bf16.msra.mxu0 %v32
    %40 = vmatprep.subr.bf16.mxu0 0
    %41 = vmatpush1.bf16.msra.mxu0 0
    %42 = vmatprep.subr.bf16.mxu0 0
    %43 = vmatpush1.bf16.msra.mxu0 0
    %44 = vmatprep.subr.bf16.mxu0 0
    %45 = vmatpush1.bf16.msra.mxu0 0
    %46 = vmatprep.subr.bf16.mxu0 0
    %47 = vmatpush1.bf16.msra.mxu0 0
    %48 = vmatprep.subr.bf16.mxu0 0
    %49 = vmatpush1.bf16.msra.mxu0 0
    %50 = vmatprep.subr.bf16.mxu0 0
    %51 = vmatpush1.bf16.msra.mxu0 0
    %52 = vmatprep.subr.bf16.mxu0 0
    %53 = vmatpush1.bf16.msra.mxu0 0
    %54 = vmatprep.subr.bf16.mxu0 0
    %55 = vmatpush1.bf16.msra.mxu0 0
    %56 = vmatprep.subr.bf16.mxu0 0
    %57 = vmatpush1.bf16.msra.mxu0 0
    %58 = vmatprep.subr.bf16.mxu0 0
    %59 = vmatpush1.bf16.msra.mxu0 0
    %60 = vmatprep.subr.bf16.mxu0 0
    %61 = vmatpush1.bf16.msra.mxu0 0
    %62 = vmatprep.subr.bf16.mxu0 0
    %63 = vmatpush1.bf16.msra.mxu0 0
    %64 = vmatprep.subr.bf16.mxu0 0
    %65 = vmatpush1.bf16.msra.mxu0 0
    %66 = vmatprep.subr.bf16.mxu0 0
    %67 = vmatpush1.bf16.msra.mxu0 0
    %68 = vmatprep.subr.bf16.mxu0 0
    %69 = vmatpush1.bf16.msra.mxu0 0
    %70 = vmatprep.mubr.bf16.mxu0 0
    %71 = vmatmul.mubr.bf16.gmra.mrb[0].mxu0 %v36
    %v72 = vpop.f32.mrb[0].mxu0
    %v73 = vadd.f32 0.0, %v72
    %v74 = vpop.f32.mrb[0].mxu0
    %v75 = vpop.f32.mrb[0].mxu0
    %v76 = vadd.f32 0.0, %v75
    %v77 = vpop.f32.mrb[0].mxu0
    %78 = vdwg.mxu0
    %79 = vadd.xlane.f32.xlu0 %v73
    %v80 = vpop.xlane.xlu0 %79
    %81 = vadd.xlane.f32.xlu0 %v76
    %v82 = vpop.xlane.xlu0 %81
    %v83 = vmul.f32 %v80, 0.03125
    %v84 = vmul.f32 %v82, 0.03125
    %v85 = vmul.f32 %v73, %v73
    %v86 = vmul.f32 %v76, %v76
    %87 = vadd.xlane.f32.xlu0 %v85
    %v88 = vpop.xlane.xlu0 %87
    %89 = vadd.xlane.f32.xlu0 %v86
    %v90 = vpop.xlane.xlu0 %89
    %v91 = vmul.f32 %v88, 0.03125
    %v92 = vmul.f32 %v90, 0.03125
    %v93 = vmul.f32 %v83, %v83
    %v94 = vmul.f32 %v84, %v84
    %v95 = vsub.f32 %v91, %v93
    %v96 = vsub.f32 %v92, %v94
    %v97 = vmax.f32 %v95, 0.0
    %v98 = vmax.f32 %v96, 0.0
    %v99 = vld [vmem:[%s2] sm:$0xff]
    %v100 = vld [vmem:[%s2 + $0x8] sm:$0xff]
    %v101 = vadd.f32 %v97, 1e-05
    %v102 = vadd.f32 %v98, 1e-05
    %v103 = vrsqrt.pop %v101
    %v104 = vrsqrt.pop %v102
    %v105 = vmul.f32 %v99, %v103
    %v106 = vmul.f32 %v100, %v104
    %v107 = vld [vmem:[%s3] sm:$0xff]
    %v108 = vld [vmem:[%s3 + $0x8] sm:$0xff]
    %v109 = vmul.f32 %v83, %v105
    %v110 = vmul.f32 %v84, %v106
    %v111 = vsub.f32 %v107, %v109
    %v112 = vsub.f32 %v108, %v110
    %114 = vset.pattern.permute.xlu0 0
    %115 = vperm.xlu0 %114, %v105
    %v116 = vpop.permute.xlu0 %115
    %119 = vset.pattern.permute.xlu0 0
    %120 = vperm.xlu0 %119, %v106
    %v121 = vpop.permute.xlu0 %120
    %v123 = vmul.f32 %v73, %v116
    %v124 = vmul.f32 %v76, %v121
    %126 = vset.pattern.permute.xlu0 0
    %127 = vperm.xlu0 %126, %v111
    %v128 = vpop.permute.xlu0 %127
    %131 = vset.pattern.permute.xlu0 0
    %132 = vperm.xlu0 %131, %v112
    %v133 = vpop.permute.xlu0 %132
    %v135 = vadd.f32 %v123, %v128
    %v136 = vadd.f32 %v124, %v133
    %v137 = vmax.f32 %v135, 0.0
    %v138 = vmax.f32 %v136, 0.0
    %139 = vst [vmem:[#allocation2] sm:$0xff] %v137
    %140 = vst [vmem:[#allocation2 + $0x8] sm:$0xff] %v138
    // Predicated region
    $region18: #{tpu_custom_call.1} parent=1 // pred_check
      _
    $region19: #{tpu_custom_call.1} parent=1 // pred_check_branch
      %142 = sbr.rel (0) target = $region21
    $region20: #{tpu_custom_call.1} parent=1 // pred_region
      %s144 = ssub.s32 256, 256
      %145 = vsyncadd [#allocation3], %s144
      %s146 = sshll.u32 [#allocation2], 4
      %s147 = int_to_ptr.vmem [resolvable:$true] %s146
      %152 = dma.vmem_to_hbm [thread:$0]  %s147, 256, %s4, [#allocation3], 128, 128, 8
    $region21: #{tpu_custom_call.1} parent=1 // pred_fallthru
      _
    // Predicated region
    $region22: #{tpu_custom_call.1} parent=1 // pred_check
      _
    $region23: #{tpu_custom_call.1} parent=1 // pred_check_branch
      %154 = sbr.rel (0) target = $region25
    $region24: #{tpu_custom_call.1} parent=1 // pred_region
      %155 = dma.done [#allocation3], 256
    $region25: #{tpu_custom_call.1} parent=1 // pred_fallthru
      _
    %156 = vsyncpa [#allocation3], 1

</llo_original>
